<compile_context>
chip_gen: v5e
topology: v5e:2x2
jax: 0.10.0
libtpu: 0.0.40
codegen_flags: <defaults>
</compile_context>

<pallas_src>
import math

import jax
import jax.numpy as jnp
from jax.experimental import pallas as pl
from jax.experimental.pallas import tpu as pltpu

LANE = 128           # TPU lane width
BF16_SUBLANE = 16    # bf16 packs 16 rows per vreg
F32_SUBLANE = 8
OUT_LANES = 8        # action_dim padded to 8 lanes for the HBM output stream


def _round_up(x, m):
    return (x + m - 1) // m * m


def _cdiv(a, b):
    return -(-a // b)


def dqn_kernel(x_ref, w1_ref, b1_ref, w2_ref, b2_ref, w3_ref, b3_ref, o_ref):
    # Fused 3-layer MLP on one (TB, state_dim) batch tile.
    x = x_ref[...]                                                    # bf16 (TB, 16)
    h1 = jnp.dot(x, w1_ref[...], preferred_element_type=jnp.float32) + b1_ref[...]
    h1 = jnp.maximum(h1, 0.0).astype(jnp.bfloat16)                    # (TB, 128)
    h2 = jnp.dot(h1, w2_ref[...], preferred_element_type=jnp.float32) + b2_ref[...]
    h2 = jnp.maximum(h2, 0.0).astype(jnp.bfloat16)                    # (TB, 128) padded
    out = jnp.dot(h2, w3_ref[...], preferred_element_type=jnp.float32)  # (TB, 128) MXU
    out = out[:, :o_ref.shape[1]] + b3_ref[...]                       # lane-slice to 8
    o_ref[...] = out.astype(o_ref.dtype)                              # narrow HBM store


def init_dqn_params(key, state_dim, action_dim):
    """Deterministic f32 init mimicking PyTorch nn.Linear default U(-1/sqrt(fan_in), +).

    Weights stored pre-transposed as (in_features, out_features); biases (1, out).
    """
    if state_dim == 0:
        raise ValueError("State dimension must be greater than zero.")
    dims = [(state_dim, 128), (128, 64), (64, action_dim)]
    params = []
    for fan_in, fan_out in dims:
        key, kw, kb = jax.random.split(key, 3)
        bound = 1.0 / math.sqrt(fan_in)
        w = jax.random.uniform(kw, (fan_in, fan_out), jnp.float32, -bound, bound)
        b = jax.random.uniform(kb, (1, fan_out), jnp.float32, -bound, bound)
        params.extend([w, b])
    return tuple(params)


def prepare_kernel_params(params):
    """Pad hidden2 to 128 lanes, w3 columns to 128 (MXU), b3/output to 8 lanes.

    Weights cast to bf16, biases stay f32.
    """
    w1, b1, w2, b2, w3, b3 = params
    h2 = w2.shape[1]
    act = w3.shape[1]
    h2p = _round_up(h2, LANE)
    w3_cols = _round_up(act, LANE)        # keep the last matmul 128-wide on the MXU
    out_p = _round_up(act, OUT_LANES)     # narrow HBM output width (8 lanes)
    w2p = jnp.zeros((w2.shape[0], h2p), jnp.float32).at[:, :h2].set(w2)
    b2p = jnp.zeros((1, h2p), jnp.float32).at[:, :h2].set(b2)
    w3p = jnp.zeros((h2p, w3_cols), jnp.float32).at[:h2, :act].set(w3)
    b3p = jnp.zeros((1, out_p), jnp.float32).at[:, :act].set(b3)
    return (
        w1.astype(jnp.bfloat16), b1,
        w2p.astype(jnp.bfloat16), b2p,
        w3p.astype(jnp.bfloat16), b3p,
    )


def dqn_forward(state, kernel_params, action_dim, *, tb=4096):
    """Run the fused DQN MLP. state: (B, state_dim) float32. Returns (B, action_dim) f32."""
    w1, b1, w2, b2, w3, b3 = kernel_params
    B, state_dim = state.shape
    out_lanes = b3.shape[1]                      # narrow output width (8)

    # --- Tiling: balance tiles (never pad B by a whole extra tile) and keep the
    # grid >= 2 (and even) when B allows so the "parallel" axis feeds both v7x TCs.
    num_tiles = max(_cdiv(B, tb), 1)
    if B >= 2 * BF16_SUBLANE:
        num_tiles = max(num_tiles, 2)
    if num_tiles > 1 and num_tiles % 2:
        num_tiles += 1
    TB = _round_up(_cdiv(B, num_tiles), BF16_SUBLANE)
    B_pad = num_tiles * TB                       # padding < 16 rows per tile

    x = state.astype(jnp.bfloat16)
    if B_pad != B:
        x = jnp.pad(x, ((0, B_pad - B), (0, 0)))

    grid = (num_tiles,)

    def resident(shape):
        # Full-block spec, constant index_map -> stays VMEM-resident across grid steps.
        return pl.BlockSpec(shape, lambda i: (0, 0))

    in_specs = [
        pl.BlockSpec((TB, state_dim), lambda i: (i, 0)),   # streamed batch tile
        resident(w1.shape), resident(b1.shape),
        resident(w2.shape), resident(b2.shape),
        resident(w3.shape), resident(b3.shape),
    ]
    out_specs = pl.BlockSpec((TB, out_lanes), lambda i: (i, 0))  # narrow (32 B/row) store

    # Cost estimate (narrow output; padded-matmul flops).
    flops = 2 * B_pad * (
        w1.shape[0] * w1.shape[1] + w2.shape[0] * w2.shape[1] + w3.shape[0] * w3.shape[1]
    )
    weight_bytes = sum(int(a.size) * a.dtype.itemsize for a in (w1, b1, w2, b2, w3, b3))
    bytes_accessed = int(x.size) * x.dtype.itemsize + B_pad * out_lanes * 4 + weight_bytes

    # VMEM budget derived from actual (lane-padded, double-buffered) tile sizes.
    def _vmem_footprint(arr):
        sub = BF16_SUBLANE if arr.dtype == jnp.bfloat16 else F32_SUBLANE
        return _round_up(arr.shape[0], sub) * _round_up(arr.shape[1], LANE) * arr.dtype.itemsize

    w_vmem = sum(_vmem_footprint(a) for a in (w1, b1, w2, b2, w3, b3))
    in_buf = TB * LANE * 2          # (TB,16) bf16 tile lane-pads to 128 in VMEM
    out_buf = TB * LANE * 4         # (TB,8)  f32 tile lane-pads to 128 in VMEM
    scratch = 2 * TB * LANE * 4     # h1 / h2 f32 intermediates
    vmem_limit = int(min(2 * (in_buf + out_buf) + 2 * w_vmem + scratch + (8 << 20),
                         56 << 20))

    out = pl.pallas_call(
        dqn_kernel,
        out_shape=jax.ShapeDtypeStruct((B_pad, out_lanes), jnp.float32),
        grid=grid,
        in_specs=in_specs,
        out_specs=out_specs,
        compiler_params=pltpu.CompilerParams(
            dimension_semantics=("parallel",),
            vmem_limit_bytes=vmem_limit,
        ),
        cost_estimate=pl.CostEstimate(
            flops=flops, transcendentals=0, bytes_accessed=bytes_accessed
        ),
    )(x, w1, b1, w2, b2, w3, b3)

    return out[:B, :action_dim]


def dqn_reference(state, kernel_params, action_dim):
    """Pure-JAX reference mirroring the kernel's bf16-in / f32-accumulate numerics."""
    w1, b1, w2, b2, w3, b3 = [jnp.asarray(p, jnp.float32) for p in kernel_params]
    x = state.astype(jnp.bfloat16).astype(jnp.float32)
    h1 = jnp.maximum(x @ w1 + b1, 0.0)
    h1 = h1.astype(jnp.bfloat16).astype(jnp.float32)
    h2 = jnp.maximum(h1 @ w2 + b2, 0.0)
    h2 = h2.astype(jnp.bfloat16).astype(jnp.float32)
    out = (h2 @ w3)[:, :action_dim] + b3[:, :action_dim]
    return out


if __name__ == "__main__":
    key = jax.random.PRNGKey(0)
    batch, state_dim, action_dim = 2, 16, 4

    key, k_state = jax.random.split(key)
    state = jax.random.normal(k_state, (batch, state_dim), jnp.float32)

    params = init_dqn_params(key, state_dim, action_dim)
    kparams = prepare_kernel_params(params)

    out = dqn_forward(state, kparams, action_dim)
    jax.block_until_ready(out)

    ref = dqn_reference(state, kparams, action_dim)
    assert out.shape == (batch, action_dim), out.shape
    assert jnp.allclose(out, ref, atol=1e-3, rtol=1e-3), jnp.max(jnp.abs(out - ref))

    print("KERNEL_OK")
</pallas_src>

<mosaic_0001>
module attributes {stable_mosaic.version = 11 : i64} {
  func.func @dqn_kernel(%arg0: i32, %arg1: memref<16x16xbf16, #tpu.memory_space<vmem>>, %arg2: memref<16x128xbf16, #tpu.memory_space<vmem>>, %arg3: memref<1x128xf32, #tpu.memory_space<vmem>>, %arg4: memref<128x128xbf16, #tpu.memory_space<vmem>>, %arg5: memref<1x128xf32, #tpu.memory_space<vmem>>, %arg6: memref<128x128xbf16, #tpu.memory_space<vmem>>, %arg7: memref<1x8xf32, #tpu.memory_space<vmem>>, %arg8: memref<16x8xf32, #tpu.memory_space<vmem>>) attributes {dimension_semantics = [#tpu.dimension_semantics<parallel>], iteration_bounds = array<i64: 1>, scalar_prefetch = 0 : i64, scratch_operands = 0 : i64, tpu.core_type = #tpu.core_type<tc>, window_params = [{transform_indices = @transform_0, window_bounds = array<i64: 16, 16>}, {pipeline_mode = #tpu.pipeline_mode<synchronous>, transform_indices = @transform_1, window_bounds = array<i64: 16, 128>}, {pipeline_mode = #tpu.pipeline_mode<synchronous>, transform_indices = @transform_2, window_bounds = array<i64: 1, 128>}, {pipeline_mode = #tpu.pipeline_mode<synchronous>, transform_indices = @transform_3, window_bounds = array<i64: 128, 128>}, {pipeline_mode = #tpu.pipeline_mode<synchronous>, transform_indices = @transform_4, window_bounds = array<i64: 1, 128>}, {pipeline_mode = #tpu.pipeline_mode<synchronous>, transform_indices = @transform_5, window_bounds = array<i64: 128, 128>}, {pipeline_mode = #tpu.pipeline_mode<synchronous>, transform_indices = @transform_6, window_bounds = array<i64: 1, 8>}, {transform_indices = @transform_7, window_bounds = array<i64: 16, 8>}]} {
    %c0 = arith.constant 0 : index
    %c0_0 = arith.constant 0 : index
    %0 = vector.load %arg1[%c0, %c0_0] : memref<16x16xbf16, #tpu.memory_space<vmem>>, vector<16x16xbf16>
    %c0_1 = arith.constant 0 : index
    %c0_2 = arith.constant 0 : index
    %1 = vector.load %arg2[%c0_1, %c0_2] : memref<16x128xbf16, #tpu.memory_space<vmem>>, vector<16x128xbf16>
    %cst = arith.constant dense<0.000000e+00> : vector<16x128xf32>
    %2 = tpu.matmul %0, %1, %cst {dimension_numbers = #tpu.dot_dimension_numbers<[1], [0], [0], [1], [0, 0, 1, 1], [], []>} : vector<16x16xbf16>, vector<16x128xbf16>, vector<16x128xf32> -> vector<16x128xf32>
    %c0_3 = arith.constant 0 : index
    %c0_4 = arith.constant 0 : index
    %3 = vector.load %arg3[%c0_3, %c0_4] : memref<1x128xf32, #tpu.memory_space<vmem>>, vector<1x128xf32>
    %4 = vector.broadcast %3 : vector<1x128xf32> to vector<16x128xf32>
    %5 = arith.addf %2, %4 : vector<16x128xf32>
    %cst_5 = arith.constant 0.000000e+00 : f32
    %6 = vector.broadcast %cst_5 : f32 to vector<16x128xf32>
    %7 = arith.maximumf %5, %6 : vector<16x128xf32>
    %8 = arith.truncf %7 : vector<16x128xf32> to vector<16x128xbf16>
    %c0_6 = arith.constant 0 : index
    %c0_7 = arith.constant 0 : index
    %9 = vector.load %arg4[%c0_6, %c0_7] : memref<128x128xbf16, #tpu.memory_space<vmem>>, vector<128x128xbf16>
    %cst_8 = arith.constant dense<0.000000e+00> : vector<16x128xf32>
    %10 = tpu.matmul %8, %9, %cst_8 {dimension_numbers = #tpu.dot_dimension_numbers<[1], [0], [0], [1], [0, 0, 1, 1], [], []>} : vector<16x128xbf16>, vector<128x128xbf16>, vector<16x128xf32> -> vector<16x128xf32>
    %c0_9 = arith.constant 0 : index
    %c0_10 = arith.constant 0 : index
    %11 = vector.load %arg5[%c0_9, %c0_10] : memref<1x128xf32, #tpu.memory_space<vmem>>, vector<1x128xf32>
    %12 = vector.broadcast %11 : vector<1x128xf32> to vector<16x128xf32>
    %13 = arith.addf %10, %12 : vector<16x128xf32>
    %cst_11 = arith.constant 0.000000e+00 : f32
    %14 = vector.broadcast %cst_11 : f32 to vector<16x128xf32>
    %15 = arith.maximumf %13, %14 : vector<16x128xf32>
    %16 = arith.truncf %15 : vector<16x128xf32> to vector<16x128xbf16>
    %c0_12 = arith.constant 0 : index
    %c0_13 = arith.constant 0 : index
    %17 = vector.load %arg6[%c0_12, %c0_13] : memref<128x128xbf16, #tpu.memory_space<vmem>>, vector<128x128xbf16>
    %cst_14 = arith.constant dense<0.000000e+00> : vector<16x128xf32>
    %18 = tpu.matmul %16, %17, %cst_14 {dimension_numbers = #tpu.dot_dimension_numbers<[1], [0], [0], [1], [0, 0, 1, 1], [], []>} : vector<16x128xbf16>, vector<128x128xbf16>, vector<16x128xf32> -> vector<16x128xf32>
    %19 = vector.extract_strided_slice %18 {offsets = [0, 0], sizes = [16, 8], strides = [1, 1]} : vector<16x128xf32> to vector<16x8xf32>
    %c0_15 = arith.constant 0 : index
    %c0_16 = arith.constant 0 : index
    %20 = vector.load %arg7[%c0_15, %c0_16] : memref<1x8xf32, #tpu.memory_space<vmem>>, vector<1x8xf32>
    %21 = vector.broadcast %20 : vector<1x8xf32> to vector<16x8xf32>
    %22 = arith.addf %19, %21 : vector<16x8xf32>
    %c0_17 = arith.constant 0 : index
    %c0_18 = arith.constant 0 : index
    %23 = vector.load %arg8[%c0_17, %c0_18] : memref<16x8xf32, #tpu.memory_space<vmem>>, vector<16x8xf32>
    tpu.vector_store %arg8[%c0_17, %c0_18], %22 {strides = array<i32>} : memref<16x8xf32, #tpu.memory_space<vmem>>, vector<16x8xf32>,
    return
  }
  func.func @transform_0(%arg0: i32) -> (i32, i32) {
    %c0_i32 = arith.constant 0 : i32
    %c0_i32_0 = arith.constant 0 : i32
    return %arg0, %c0_i32 : i32, i32
  }
  func.func @transform_1(%arg0: i32) -> (i32, i32) {
    %c0_i32 = arith.constant 0 : i32
    %c0_i32_0 = arith.constant 0 : i32
    %c0_i32_1 = arith.constant 0 : i32
    return %c0_i32, %c0_i32_0 : i32, i32
  }
  func.func @transform_2(%arg0: i32) -> (i32, i32) {
    %c0_i32 = arith.constant 0 : i32
    %c0_i32_0 = arith.constant 0 : i32
    %c0_i32_1 = arith.constant 0 : i32
    return %c0_i32, %c0_i32_0 : i32, i32
  }
  func.func @transform_3(%arg0: i32) -> (i32, i32) {
    %c0_i32 = arith.constant 0 : i32
    %c0_i32_0 = arith.constant 0 : i32
    %c0_i32_1 = arith.constant 0 : i32
    return %c0_i32, %c0_i32_0 : i32, i32
  }
  func.func @transform_4(%arg0: i32) -> (i32, i32) {
    %c0_i32 = arith.constant 0 : i32
    %c0_i32_0 = arith.constant 0 : i32
    %c0_i32_1 = arith.constant 0 : i32
    return %c0_i32, %c0_i32_0 : i32, i32
  }
  func.func @transform_5(%arg0: i32) -> (i32, i32) {
    %c0_i32 = arith.constant 0 : i32
    %c0_i32_0 = arith.constant 0 : i32
    %c0_i32_1 = arith.constant 0 : i32
    return %c0_i32, %c0_i32_0 : i32, i32
  }
  func.func @transform_6(%arg0: i32) -> (i32, i32) {
    %c0_i32 = arith.constant 0 : i32
    %c0_i32_0 = arith.constant 0 : i32
    %c0_i32_1 = arith.constant 0 : i32
    return %c0_i32, %c0_i32_0 : i32, i32
  }
  func.func @transform_7(%arg0: i32) -> (i32, i32) {
    %c0_i32 = arith.constant 0 : i32
    %c0_i32_0 = arith.constant 0 : i32
    return %arg0, %c0_i32 : i32, i32
  }
}

</mosaic_0001>

<llo_original>
// kernel: tpu_custom_call.1
$region0: #{tpu_custom_call.1}
  #allocation0 [shape = 'u32[]', space=smem, size = 0x4, offset = 0x4, fixed_abs, tag = 'smem constant byte address 0x4 - core index']
  #allocation1 [shape = 'u32[72,128]{1,0:T(1,128)}', space=vmem, size = 0x9000, scoped, tag = 'internal scratch']
  %s0 = inlined_call_operand.hbm [shape: bf16[16,16], index: 0, kind: input, shape index: {}]
  %s1 = inlined_call_operand.hbm [shape: bf16[16,128], index: 1, kind: input, shape index: {}]
  %s2 = inlined_call_operand.vmem [shape: f32[1,128], index: 2, kind: input, shape index: {}]
  %s3 = inlined_call_operand.hbm [shape: bf16[128,128], index: 3, kind: input, shape index: {}]
  %s4 = inlined_call_operand.vmem [shape: f32[1,128], index: 4, kind: input, shape index: {}]
  %s5 = inlined_call_operand.hbm [shape: bf16[128,128], index: 5, kind: input, shape index: {}]
  %s6 = inlined_call_operand.vmem [shape: f32[1,8], index: 6, kind: input, shape index: {}]
  %s7 = inlined_call_operand.vmem [shape: f32[16,8], index: 7, kind: output, shape index: {}]
  %s8 = sld [smem:[#allocation0]]
  $region54: #{tpu_custom_call.1} parent=0
    _
  %s10 = ssub.s32 1, %s8
  %s11 = scalar_select 0, %s10, %s8
  $region1: #{tpu_custom_call.1} parent=0
    #allocation2 [shape = 'u8[4096]{0}', space=vmem, size = 0x1000, scoped, tag = 'input window, operand 0, single buffered']
    #allocation3 [shape = 's32[1]{0}', space=sflag, size = 0x4, scoped, tag = 'scoped memory for tpu_custom_call.1']
    #allocation4 [shape = 'u8[4096]{0}', space=vmem, size = 0x1000, scoped, tag = 'input window, operand 1, single buffered']
    #allocation5 [shape = 's32[1]{0}', space=sflag, size = 0x4, scoped, tag = 'scoped memory for tpu_custom_call.1']
    #allocation6 [shape = 'u8[32768]{0}', space=vmem, size = 0x8000, scoped, tag = 'input window, operand 3, single buffered']
    #allocation7 [shape = 'u8[32768]{0}', space=vmem, size = 0x8000, scoped, tag = 'input window, operand 5, single buffered']
    #allocation8 [shape = 's32[1]{0}', space=sflag, size = 0x4, scoped, tag = 'scoped memory for tpu_custom_call.1']
    %12 = vsyncpa [#allocation3], 0
    %13 = vsyncpa [#allocation5], 0
    %14 = vsyncpa [#allocation8], 0
    // Predicated region
    $region2: #{tpu_custom_call.1} parent=1 // pred_check
      _
    $region3: #{tpu_custom_call.1} parent=1 // pred_check_branch
      %16 = sbr.rel (0) target = $region5
    $region4: #{tpu_custom_call.1} parent=1 // pred_region
      %18 = vsyncadd [#allocation3], 0
      %s19 = sshll.u32 %s0, 4
      %s20 = int_to_ptr.hbm [resolvable:$true] %s19
      %s21 = sshll.u32 [#allocation2], 4
      %s22 = int_to_ptr.vmem [resolvable:$true] %s21
      %27 = dma.hbm_to_vmem [thread:$0]  %s20, 128, %s22, [#allocation3], 64, 64, 4
    $region5: #{tpu_custom_call.1} parent=1 // pred_fallthru
      _
    // Predicated region
    $region6: #{tpu_custom_call.1} parent=1 // pred_check
      _
    $region7: #{tpu_custom_call.1} parent=1 // pred_check_branch
      %29 = sbr.rel (0) target = $region9
    $region8: #{tpu_custom_call.1} parent=1 // pred_region
      %31 = vsyncadd [#allocation5], 0
      %s32 = sshll.u32 %s1, 4
      %s33 = int_to_ptr.hbm [resolvable:$true] %s32
      %s34 = sshll.u32 [#allocation4], 4
      %s35 = int_to_ptr.vmem [resolvable:$true] %s34
      %40 = dma.hbm_to_vmem [thread:$0]  %s33, 128, %s35, [#allocation5], 64, 64, 4
    $region9: #{tpu_custom_call.1} parent=1 // pred_fallthru
      _
    // Predicated region
    $region10: #{tpu_custom_call.1} parent=1 // pred_check
      _
    $region11: #{tpu_custom_call.1} parent=1 // pred_check_branch
      %42 = sbr.rel (0) target = $region13
    $region12: #{tpu_custom_call.1} parent=1 // pred_region
      _
    $region13: #{tpu_custom_call.1} parent=1 // pred_fallthru
      _
    // Predicated region
    $region14: #{tpu_custom_call.1} parent=1 // pred_check
      _
    $region15: #{tpu_custom_call.1} parent=1 // pred_check_branch
      %44 = sbr.rel (0) target = $region17
    $region16: #{tpu_custom_call.1} parent=1 // pred_region
      %46 = vsyncadd [#allocation5], 0
      %s47 = sshll.u32 %s3, 4
      %s48 = int_to_ptr.hbm [resolvable:$true] %s47
      %s49 = sshll.u32 [#allocation6], 4
      %s50 = int_to_ptr.vmem [resolvable:$true] %s49
      %55 = dma.hbm_to_vmem [thread:$0]  %s48, 1024, %s50, [#allocation5], 64, 64, 4
    $region17: #{tpu_custom_call.1} parent=1 // pred_fallthru
      _
    // Predicated region
    $region18: #{tpu_custom_call.1} parent=1 // pred_check
      _
    $region19: #{tpu_custom_call.1} parent=1 // pred_check_branch
      %57 = sbr.rel (0) target = $region21
    $region20: #{tpu_custom_call.1} parent=1 // pred_region
      _
    $region21: #{tpu_custom_call.1} parent=1 // pred_fallthru
      _
    // Predicated region
    $region22: #{tpu_custom_call.1} parent=1 // pred_check
      _
    $region23: #{tpu_custom_call.1} parent=1 // pred_check_branch
      %59 = sbr.rel (0) target = $region25
    $region24: #{tpu_custom_call.1} parent=1 // pred_region
      %61 = vsyncadd [#allocation8], 0
      %s62 = sshll.u32 %s5, 4
      %s63 = int_to_ptr.hbm [resolvable:$true] %s62
      %s64 = sshll.u32 [#allocation7], 4
      %s65 = int_to_ptr.vmem [resolvable:$true] %s64
      %70 = dma.hbm_to_vmem [thread:$0]  %s63, 1024, %s65, [#allocation8], 64, 64, 4
    $region25: #{tpu_custom_call.1} parent=1 // pred_fallthru
      _
    // Predicated region
    $region26: #{tpu_custom_call.1} parent=1 // pred_check
      _
    $region27: #{tpu_custom_call.1} parent=1 // pred_check_branch
      %72 = sbr.rel (0) target = $region29
    $region28: #{tpu_custom_call.1} parent=1 // pred_region
      _
    $region29: #{tpu_custom_call.1} parent=1 // pred_fallthru
      _
    // Predicated region
    $region30: #{tpu_custom_call.1} parent=1 // pred_check
      _
    $region31: #{tpu_custom_call.1} parent=1 // pred_check_branch
      %74 = sbr.rel (0) target = $region33
    $region32: #{tpu_custom_call.1} parent=1 // pred_region
      %76 = dma.done [#allocation3], 128
    $region33: #{tpu_custom_call.1} parent=1 // pred_fallthru
      _
    // Predicated region
    $region34: #{tpu_custom_call.1} parent=1 // pred_check
      _
    $region35: #{tpu_custom_call.1} parent=1 // pred_check_branch
      %78 = sbr.rel (0) target = $region37
    $region36: #{tpu_custom_call.1} parent=1 // pred_region
      %80 = dma.done [#allocation5], 128
    $region37: #{tpu_custom_call.1} parent=1 // pred_fallthru
      _
    // Predicated region
    $region38: #{tpu_custom_call.1} parent=1 // pred_check
      _
    $region39: #{tpu_custom_call.1} parent=1 // pred_check_branch
      %82 = sbr.rel (0) target = $region41
    $region40: #{tpu_custom_call.1} parent=1 // pred_region
      %84 = dma.done [#allocation5], 1024
    $region41: #{tpu_custom_call.1} parent=1 // pred_fallthru
      _
    // Predicated region
    $region42: #{tpu_custom_call.1} parent=1 // pred_check
      _
    $region43: #{tpu_custom_call.1} parent=1 // pred_check_branch
      %86 = sbr.rel (0) target = $region45
    $region44: #{tpu_custom_call.1} parent=1 // pred_region
      %88 = dma.done [#allocation8], 1024
    $region45: #{tpu_custom_call.1} parent=1 // pred_fallthru
      _
    %v90 = vld [vmem:[#allocation2] sm:$0xf]
    %v91 = vld [vmem:[#allocation2 + $0x4] sm:$0xf]
    %v92 = vld [vmem:[#allocation4] sm:$0xf]
    %v93 = vld [vmem:[#allocation4 + $0x4] sm:$0xf]
    %v94 = vld [vmem:[%s2] sm:$0x1]
    %v96 = vperm.slane %v94, 0
    %v100 = vunpack.c.l.b16 %v90
    %v101 = vunpack.c.l.b16 %v91
    %v102 = vpack.c.b16 %v101, %v100
    %v105 = vunpack.c.l.b16 %v92
    %v106 = vunpack.c.l.b16 %v93
    %v107 = vpack.c.b16 %v106, %v105
    %vm109 = vcmask 130048
    %v111 = vsel %vm109, %v102, 0
    %113 = vmatpush.bf16.msra.mxu0 0
    %114 = vmatpush.bf16.msra.mxu0 0
    %115 = vmatpush.bf16.msra.mxu0 0
    %116 = vmatpush.bf16.msra.mxu0 0
    %117 = vmatpush.bf16.msra.mxu0 0
    %118 = vmatpush.bf16.msra.mxu0 0
    %119 = vmatpush.bf16.msra.mxu0 0
    %120 = vmatpush.bf16.msra.mxu0 %v107
    %121 = vmatmul.bf16.gmra.mxu0 %v111
    %v122 = vpop.f32.mrf.mxu0
    %v123 = vadd.f32 %v96, %v122
    %v124 = vpop.f32.mrf.mxu0
    %v125 = vadd.f32 %v96, %v124
    %126 = vdwg.mxu0
    %v127 = vmax.f32 %v123, 0.0
    %v128 = vmax.f32 %v125, 0.0
    %v129 = vpack.c.bf16 %v128, %v127
    %v130 = vld [vmem:[#allocation6] sm:$0xf]
    %v131 = vld [vmem:[#allocation6 + $0x4] sm:$0xf]
    %v132 = vld [vmem:[#allocation6 + $0x8] sm:$0xf]
    %v133 = vld [vmem:[#allocation6 + $0xc] sm:$0xf]
    %v134 = vld [vmem:[#allocation6 + $0x10] sm:$0xf]
    %v135 = vld [vmem:[#allocation6 + $0x14] sm:$0xf]
    %v136 = vld [vmem:[#allocation6 + $0x18] sm:$0xf]
    %v137 = vld [vmem:[#allocation6 + $0x1c] sm:$0xf]
    %v138 = vld [vmem:[#allocation6 + $0x20] sm:$0xf]
    %v139 = vld [vmem:[#allocation6 + $0x24] sm:$0xf]
    %v140 = vld [vmem:[#allocation6 + $0x28] sm:$0xf]
    %v141 = vld [vmem:[#allocation6 + $0x2c] sm:$0xf]
    %v142 = vld [vmem:[#allocation6 + $0x30] sm:$0xf]
    %v143 = vld [vmem:[#allocation6 + $0x34] sm:$0xf]
    %v144 = vld [vmem:[#allocation6 + $0x38] sm:$0xf]
    %v145 = vld [vmem:[#allocation6 + $0x3c] sm:$0xf]
    %v146 = vld [vmem:[%s4] sm:$0x1]
    %v148 = vperm.slane %v146, 0
    %v166 = vunpack.c.l.b16 %v130
    %v167 = vunpack.c.l.b16 %v131
    %v168 = vunpack.c.l.b16 %v132
    %v169 = vunpack.c.l.b16 %v133
    %v170 = vunpack.c.l.b16 %v134
    %v171 = vunpack.c.l.b16 %v135
    %v172 = vunpack.c.l.b16 %v136
    %v173 = vunpack.c.l.b16 %v137
    %v174 = vunpack.c.l.b16 %v138
    %v175 = vunpack.c.l.b16 %v139
    %v176 = vunpack.c.l.b16 %v140
    %v177 = vunpack.c.l.b16 %v141
    %v178 = vunpack.c.l.b16 %v142
    %v179 = vunpack.c.l.b16 %v143
    %v180 = vunpack.c.l.b16 %v144
    %v181 = vunpack.c.l.b16 %v145
    %v182 = vpack.c.b16 %v167, %v166
    %v183 = vpack.c.b16 %v169, %v168
    %v184 = vpack.c.b16 %v171, %v170
    %v185 = vpack.c.b16 %v173, %v172
    %v186 = vpack.c.b16 %v175, %v174
    %v187 = vpack.c.b16 %v177, %v176
    %v188 = vpack.c.b16 %v179, %v178
    %v189 = vpack.c.b16 %v181, %v180
    %198 = vmatpush.bf16.msra.mxu0 %v189
    %199 = vmatpush.bf16.msra.mxu0 %v188
    %200 = vmatpush.bf16.msra.mxu0 %v187
    %201 = vmatpush.bf16.msra.mxu0 %v186
    %202 = vmatpush.bf16.msra.mxu0 %v185
    %203 = vmatpush.bf16.msra.mxu0 %v184
    %204 = vmatpush.bf16.msra.mxu0 %v183
    %205 = vmatpush.bf16.msra.mxu0 %v182
    %206 = vmatmul.bf16.gmra.mxu0 %v129
    %v207 = vpop.f32.mrf.mxu0
    %v208 = vadd.f32 %v148, %v207
    %v209 = vpop.f32.mrf.mxu0
    %v210 = vadd.f32 %v148, %v209
    %211 = vdwg.mxu0
    %v212 = vmax.f32 %v208, 0.0
    %v213 = vmax.f32 %v210, 0.0
    %v214 = vpack.c.bf16 %v213, %v212
    %v215 = vld [vmem:[#allocation7] sm:$0xf]
    %v216 = vld [vmem:[#allocation7 + $0x4] sm:$0xf]
    %v217 = vld [vmem:[#allocation7 + $0x8] sm:$0xf]
    %v218 = vld [vmem:[#allocation7 + $0xc] sm:$0xf]
    %v219 = vld [vmem:[#allocation7 + $0x10] sm:$0xf]
    %v220 = vld [vmem:[#allocation7 + $0x14] sm:$0xf]
    %v221 = vld [vmem:[#allocation7 + $0x18] sm:$0xf]
    %v222 = vld [vmem:[#allocation7 + $0x1c] sm:$0xf]
    %v223 = vld [vmem:[#allocation7 + $0x20] sm:$0xf]
    %v224 = vld [vmem:[#allocation7 + $0x24] sm:$0xf]
    %v225 = vld [vmem:[#allocation7 + $0x28] sm:$0xf]
    %v226 = vld [vmem:[#allocation7 + $0x2c] sm:$0xf]
    %v227 = vld [vmem:[#allocation7 + $0x30] sm:$0xf]
    %v228 = vld [vmem:[#allocation7 + $0x34] sm:$0xf]
    %v229 = vld [vmem:[#allocation7 + $0x38] sm:$0xf]
    %v230 = vld [vmem:[#allocation7 + $0x3c] sm:$0xf]
    %v247 = vunpack.c.l.b16 %v215
    %v248 = vunpack.c.l.b16 %v216
    %v249 = vunpack.c.l.b16 %v217
    %v250 = vunpack.c.l.b16 %v218
    %v251 = vunpack.c.l.b16 %v219
    %v252 = vunpack.c.l.b16 %v220
    %v253 = vunpack.c.l.b16 %v221
    %v254 = vunpack.c.l.b16 %v222
    %v255 = vunpack.c.l.b16 %v223
    %v256 = vunpack.c.l.b16 %v224
    %v257 = vunpack.c.l.b16 %v225
    %v258 = vunpack.c.l.b16 %v226
    %v259 = vunpack.c.l.b16 %v227
    %v260 = vunpack.c.l.b16 %v228
    %v261 = vunpack.c.l.b16 %v229
    %v262 = vunpack.c.l.b16 %v230
    %v263 = vpack.c.b16 %v248, %v247
    %v264 = vpack.c.b16 %v250, %v249
    %v265 = vpack.c.b16 %v252, %v251
    %v266 = vpack.c.b16 %v254, %v253
    %v267 = vpack.c.b16 %v256, %v255
    %v268 = vpack.c.b16 %v258, %v257
    %v269 = vpack.c.b16 %v260, %v259
    %v270 = vpack.c.b16 %v262, %v261
    %279 = vmatpush.bf16.msra.mxu0 %v270
    %280 = vmatpush.bf16.msra.mxu0 %v269
    %281 = vmatpush.bf16.msra.mxu0 %v268
    %282 = vmatpush.bf16.msra.mxu0 %v267
    %283 = vmatpush.bf16.msra.mxu0 %v266
    %284 = vmatpush.bf16.msra.mxu0 %v265
    %285 = vmatpush.bf16.msra.mxu0 %v264
    %286 = vmatpush.bf16.msra.mxu0 %v263
    %287 = vmatmul.bf16.gmra.mxu0 %v214
    %v288 = vpop.f32.mrf.mxu0
    %v289 = vadd.f32 0.0, %v288
    %v290 = vpop.f32.mrf.mxu0
    %v291 = vadd.f32 0.0, %v290
    %292 = vdwg.mxu0
    %v293 = vld [vmem:[%s6] sm:$0x1]
    %v295 = vperm.slane %v293, 0
    %v297 = vadd.f32 %v289, %v295
    %v298 = vadd.f32 %v291, %v295
    %vm299 = vcmask 64512
    %300 = vst.msk [vmem:[%s7] sm:$0xff] %vm299, %v297
    %301 = vst.msk [vmem:[%s7 + $0x8] sm:$0xff] %vm299, %v298
    // Predicated region
    $region46: #{tpu_custom_call.1} parent=1 // pred_check
      _
    $region47: #{tpu_custom_call.1} parent=1 // pred_check_branch
      %303 = sbr.rel (0) target = $region49
    $region48: #{tpu_custom_call.1} parent=1 // pred_region
      _
    $region49: #{tpu_custom_call.1} parent=1 // pred_fallthru
      _
    // Predicated region
    $region50: #{tpu_custom_call.1} parent=1 // pred_check
      _
    $region51: #{tpu_custom_call.1} parent=1 // pred_check_branch
      %305 = sbr.rel (0) target = $region53
    $region52: #{tpu_custom_call.1} parent=1 // pred_region
      _
    $region53: #{tpu_custom_call.1} parent=1 // pred_fallthru
      _
    %306 = vsyncpa [#allocation3], 1
    %307 = vsyncpa [#allocation5], 1
    %308 = vsyncpa [#allocation8], 1

</llo_original>
